<compile_context>
chip_gen: v7x
topology: tpu7x:2x2x1
jax: 0.10.0
libtpu: 0.0.40
codegen_flags: <defaults>
</compile_context>

<pallas_src>
import jax
import jax.numpy as jnp
from jax.experimental import pallas as pl
from jax.experimental.pallas import tpu as pltpu


def _round_up(n: int, m: int) -> int:
    return ((n + m - 1) // m) * m


def _cdiv(a: int, b: int) -> int:
    return -(-a // b)


# Double-buffered per-column VMEM footprint of the pipelined tiles:
#   x tile  (4, Bt) f32 -> sublanes padded to 8 -> 32 B/col
#   out tile(3, Bt) f32 -> sublanes padded to 8 -> 32 B/col
#   x2 buffers each                              -> 128 B/col total
_VMEM_BYTES_PER_COL = 2 * (32 + 32)


def iris_kernel(x_ref, p1_ref, p2_ref, o_ref):
    """Feature-major fused MLP + softmax.

    x_ref : [n_in,  Bt]   input features, batch on the lane axis
    p1_ref: [n_hid, n_in+1]   fc1 weights | bias column
    p2_ref: [n_out, n_hid+1]  fc2 weights | bias column
    o_ref : [n_out, Bt]   softmax probabilities (classes on sublanes)
    """
    n_in = x_ref.shape[0]
    bt = x_ref.shape[1]
    n_hid = p1_ref.shape[0]
    n_out = p2_ref.shape[0]

    x = x_ref[...]                                              # [n_in, Bt]
    p1 = p1_ref[...]                                            # [n_hid, n_in+1]
    p2 = p2_ref[...]                                            # [n_out, n_hid+1]

    # fc1 + ReLU on the VPU: h[o, b] = b1[o] + sum_k w1[o, k] * x[k, b]
    h = jnp.broadcast_to(p1[:, n_in:n_in + 1], (n_hid, bt))     # bias (lane bcast)
    for k in range(n_in):                                       # unrolled, K = 4
        wk = jnp.broadcast_to(p1[:, k:k + 1], (n_hid, bt))      # lane broadcast
        xk = jnp.broadcast_to(x[k:k + 1, :], (n_hid, bt))       # sublane broadcast
        h = h + wk * xk
    h = jnp.maximum(h, 0.0)

    # fc2 on the VPU: logits[c, b] = b2[c] + sum_j w2[c, j] * h[j, b]
    logits = jnp.broadcast_to(p2[:, n_hid:n_hid + 1], (n_out, bt))
    for j in range(n_hid):                                      # unrolled, K = 8
        wj = jnp.broadcast_to(p2[:, j:j + 1], (n_out, bt))
        hj = jnp.broadcast_to(h[j:j + 1, :], (n_out, bt))
        logits = logits + wj * hj

    # Numerically-stable softmax over the class axis (axis 0 == torch dim=1),
    # fully unrolled over n_out = 3 rows (no cross-sublane reduce op needed).
    rows = [logits[c:c + 1, :] for c in range(n_out)]           # each [1, Bt]
    m = rows[0]
    for r in rows[1:]:
        m = jnp.maximum(m, r)
    es = [jnp.exp(r - m) for r in rows]
    denom = es[0]
    for e in es[1:]:
        denom = denom + e
    inv = pl.reciprocal(denom, approx=True)                     # EUP vrcp
    inv = inv * (2.0 - denom * inv)                             # one Newton step
    o_ref[...] = jnp.concatenate([e * inv for e in es], axis=0).astype(o_ref.dtype)


def _pick_btile(b_pad: int, cap: int) -> int:
    """Lane-dense batch tile (multiple of 128) under `cap` columns."""
    cap = max(128, (cap // 128) * 128)
    if b_pad <= cap:
        if b_pad > 128:
            # >=2 grid steps so v7x megacore can shard the batch axis.
            return min(cap, _round_up(_cdiv(b_pad, 2), 128))
        return 128
    return cap


def iris_forward(x, w1, b1, w2, b2, *,
                 max_btile=None,
                 vmem_budget_bytes=24 * 1024 * 1024,
                 x_feature_major=False,
                 feature_major_output=False):
    """IrisNet forward pass.

    x : [B, 4] (torch layout) or [4, B] if x_feature_major=True.
    w1: [8, 4], b1: [8], w2: [3, 8], b2: [3]  (PyTorch nn.Linear layouts).
    Returns softmax probabilities [B, 3] (or [3, B] if feature_major_output).
    """
    n_hid, n_in = w1.shape
    n_out = w2.shape[0]

    if x_feature_major:
        x_fm = x.astype(jnp.float32)                 # already [n_in, B], no copy
        B = x_fm.shape[1]
    else:
        B = x.shape[0]
        # One fused XLA transpose+pad of the tiny [B,4] input; kept because the
        # feature-major layout is what makes the kernel's loads/stores
        # lane-dense and the big batch tile possible (see header comment).
        x_fm = x.T.astype(jnp.float32)

    b_pad = _round_up(max(B, 1), 128)

    # Tile sized from a VMEM budget (review item 1), optionally user-capped.
    budget_cap = max(128, (vmem_budget_bytes // _VMEM_BYTES_PER_COL) // 128 * 128)
    cap = budget_cap if max_btile is None else min(budget_cap,
                                                   max(128, (max_btile // 128) * 128))
    btile = _pick_btile(b_pad, cap)
    n_steps = _cdiv(b_pad, btile)                    # ragged last block allowed

    if b_pad != x_fm.shape[1]:
        x_fm = jnp.pad(x_fm, ((0, 0), (0, b_pad - x_fm.shape[1])))

    # Pack weights+bias per layer into one VMEM-resident buffer (review item 8).
    p1 = jnp.concatenate(
        [w1.astype(jnp.float32), b1.reshape(n_hid, 1).astype(jnp.float32)], axis=1)
    p2 = jnp.concatenate(
        [w2.astype(jnp.float32), b2.reshape(n_out, 1).astype(jnp.float32)], axis=1)

    vmem_limit = min(64 * 1024 * 1024,
                     max(16 * 1024 * 1024,
                         _VMEM_BYTES_PER_COL * btile + (4 * 1024 * 1024)))

    out_fm = pl.pallas_call(
        iris_kernel,
        out_shape=jax.ShapeDtypeStruct((n_out, b_pad), jnp.float32),
        grid=(n_steps,),
        in_specs=[
            pl.BlockSpec((n_in, btile), lambda i: (0, i)),        # x, pipelined
            pl.BlockSpec((n_hid, n_in + 1), lambda i: (0, 0)),    # fc1 params, resident
            pl.BlockSpec((n_out, n_hid + 1), lambda i: (0, 0)),   # fc2 params, resident
        ],
        out_specs=pl.BlockSpec((n_out, btile), lambda i: (0, i)),
        compiler_params=pltpu.CompilerParams(
            dimension_semantics=("parallel",),        # megacore split on v7x
            vmem_limit_bytes=vmem_limit,
        ),
    )(x_fm, p1, p2)

    out_fm = out_fm[:, :B]
    if feature_major_output:
        return out_fm                                  # [3, B], no relayout cost
    return out_fm.T                                    # torch semantics: [B, 3]


def init_params(key):
    # Deterministic init mimicking nn.Linear's uniform(-1/sqrt(fan_in), ...).
    k1, k2, k3, k4 = jax.random.split(key, 4)
    bound1 = 1.0 / jnp.sqrt(4.0)
    bound2 = 1.0 / jnp.sqrt(8.0)
    w1 = jax.random.uniform(k1, (8, 4), jnp.float32, -bound1, bound1)
    b1 = jax.random.uniform(k2, (8,), jnp.float32, -bound1, bound1)
    w2 = jax.random.uniform(k3, (3, 8), jnp.float32, -bound2, bound2)
    b2 = jax.random.uniform(k4, (3,), jnp.float32, -bound2, bound2)
    return w1, b1, w2, b2


def _reference(x, w1, b1, w2, b2):
    h = jnp.maximum(x @ w1.T + b1, 0.0)
    return jax.nn.softmax(h @ w2.T + b2, axis=1)


if __name__ == "__main__":
    key = jax.random.PRNGKey(0)
    kx, kx2, kp = jax.random.split(key, 3)
    w1, b1, w2, b2 = init_params(kp)

    # Small iris-like batch: 8 samples x 4 features (single grid step).
    B = 8
    x = jax.random.normal(kx, (B, 4), jnp.float32)
    out = jax.block_until_ready(iris_forward(x, w1, b1, w2, b2))
    ref = _reference(x, w1, b1, w2, b2)
    assert out.shape == (B, 3)
    assert jnp.allclose(out, ref, atol=1e-4, rtol=1e-4)
    assert jnp.allclose(jnp.sum(out, axis=1), 1.0, atol=1e-4)

    # Second check: multi-step grid with a ragged last block (B=300 -> pad 384,
    # btile=256 -> 2 steps, second block overhangs and its writes are masked).
    B2 = 300
    x2 = jax.random.normal(kx2, (B2, 4), jnp.float32)
    out2 = jax.block_until_ready(iris_forward(x2, w1, b1, w2, b2, max_btile=256))
    ref2 = _reference(x2, w1, b1, w2, b2)
    assert out2.shape == (B2, 3)
    assert jnp.allclose(out2, ref2, atol=1e-4, rtol=1e-4)

    # Feature-major fast path (no wrapper transposes) must match too.
    out3 = jax.block_until_ready(
        iris_forward(x2.T, w1, b1, w2, b2, max_btile=256,
                     x_feature_major=True, feature_major_output=True))
    assert out3.shape == (3, B2)
    assert jnp.allclose(out3.T, ref2, atol=1e-4, rtol=1e-4)

    print("KERNEL_OK")
</pallas_src>

<mosaic_0001>
module attributes {stable_mosaic.version = 11 : i64} {
  func.func @iris_kernel(%arg0: i32, %arg1: memref<4x128xf32, #tpu.memory_space<vmem>>, %arg2: memref<8x5xf32, #tpu.memory_space<vmem>>, %arg3: memref<3x9xf32, #tpu.memory_space<vmem>>, %arg4: memref<3x128xf32, #tpu.memory_space<vmem>>) attributes {dimension_semantics = [#tpu.dimension_semantics<parallel>], iteration_bounds = array<i64: 1>, scalar_prefetch = 0 : i64, scratch_operands = 0 : i64, tpu.core_type = #tpu.core_type<tc>, window_params = [{transform_indices = @transform_0, window_bounds = array<i64: 4, 128>}, {pipeline_mode = #tpu.pipeline_mode<synchronous>, transform_indices = @transform_1, window_bounds = array<i64: 8, 5>}, {pipeline_mode = #tpu.pipeline_mode<synchronous>, transform_indices = @transform_2, window_bounds = array<i64: 3, 9>}, {transform_indices = @transform_3, window_bounds = array<i64: 3, 128>}]} {
    %c0 = arith.constant 0 : index
    %c0_0 = arith.constant 0 : index
    %0 = vector.load %arg1[%c0, %c0_0] : memref<4x128xf32, #tpu.memory_space<vmem>>, vector<4x128xf32>
    %c0_1 = arith.constant 0 : index
    %c0_2 = arith.constant 0 : index
    %1 = vector.load %arg2[%c0_1, %c0_2] : memref<8x5xf32, #tpu.memory_space<vmem>>, vector<8x5xf32>
    %c0_3 = arith.constant 0 : index
    %c0_4 = arith.constant 0 : index
    %2 = vector.load %arg3[%c0_3, %c0_4] : memref<3x9xf32, #tpu.memory_space<vmem>>, vector<3x9xf32>
    %3 = vector.extract_strided_slice %1 {offsets = [0, 4], sizes = [8, 1], strides = [1, 1]} : vector<8x5xf32> to vector<8x1xf32>
    %4 = vector.shape_cast %3 : vector<8x1xf32> to vector<8x1xf32>
    %5 = vector.broadcast %4 : vector<8x1xf32> to vector<8x128xf32>
    %6 = vector.extract_strided_slice %1 {offsets = [0, 0], sizes = [8, 1], strides = [1, 1]} : vector<8x5xf32> to vector<8x1xf32>
    %7 = vector.shape_cast %6 : vector<8x1xf32> to vector<8x1xf32>
    %8 = vector.broadcast %7 : vector<8x1xf32> to vector<8x128xf32>
    %9 = vector.extract_strided_slice %0 {offsets = [0, 0], sizes = [1, 128], strides = [1, 1]} : vector<4x128xf32> to vector<1x128xf32>
    %10 = vector.shape_cast %9 : vector<1x128xf32> to vector<1x128xf32>
    %11 = vector.broadcast %10 : vector<1x128xf32> to vector<8x128xf32>
    %12 = arith.mulf %8, %11 : vector<8x128xf32>
    %13 = arith.addf %5, %12 : vector<8x128xf32>
    %14 = vector.extract_strided_slice %1 {offsets = [0, 1], sizes = [8, 1], strides = [1, 1]} : vector<8x5xf32> to vector<8x1xf32>
    %15 = vector.shape_cast %14 : vector<8x1xf32> to vector<8x1xf32>
    %16 = vector.broadcast %15 : vector<8x1xf32> to vector<8x128xf32>
    %17 = vector.extract_strided_slice %0 {offsets = [1, 0], sizes = [1, 128], strides = [1, 1]} : vector<4x128xf32> to vector<1x128xf32>
    %18 = vector.shape_cast %17 : vector<1x128xf32> to vector<1x128xf32>
    %19 = vector.broadcast %18 : vector<1x128xf32> to vector<8x128xf32>
    %20 = arith.mulf %16, %19 : vector<8x128xf32>
    %21 = arith.addf %13, %20 : vector<8x128xf32>
    %22 = vector.extract_strided_slice %1 {offsets = [0, 2], sizes = [8, 1], strides = [1, 1]} : vector<8x5xf32> to vector<8x1xf32>
    %23 = vector.shape_cast %22 : vector<8x1xf32> to vector<8x1xf32>
    %24 = vector.broadcast %23 : vector<8x1xf32> to vector<8x128xf32>
    %25 = vector.extract_strided_slice %0 {offsets = [2, 0], sizes = [1, 128], strides = [1, 1]} : vector<4x128xf32> to vector<1x128xf32>
    %26 = vector.shape_cast %25 : vector<1x128xf32> to vector<1x128xf32>
    %27 = vector.broadcast %26 : vector<1x128xf32> to vector<8x128xf32>
    %28 = arith.mulf %24, %27 : vector<8x128xf32>
    %29 = arith.addf %21, %28 : vector<8x128xf32>
    %30 = vector.extract_strided_slice %1 {offsets = [0, 3], sizes = [8, 1], strides = [1, 1]} : vector<8x5xf32> to vector<8x1xf32>
    %31 = vector.shape_cast %30 : vector<8x1xf32> to vector<8x1xf32>
    %32 = vector.broadcast %31 : vector<8x1xf32> to vector<8x128xf32>
    %33 = vector.extract_strided_slice %0 {offsets = [3, 0], sizes = [1, 128], strides = [1, 1]} : vector<4x128xf32> to vector<1x128xf32>
    %34 = vector.shape_cast %33 : vector<1x128xf32> to vector<1x128xf32>
    %35 = vector.broadcast %34 : vector<1x128xf32> to vector<8x128xf32>
    %36 = arith.mulf %32, %35 : vector<8x128xf32>
    %37 = arith.addf %29, %36 : vector<8x128xf32>
    %cst = arith.constant 0.000000e+00 : f32
    %38 = vector.broadcast %cst : f32 to vector<8x128xf32>
    %39 = arith.maximumf %37, %38 : vector<8x128xf32>
    %40 = vector.extract_strided_slice %2 {offsets = [0, 8], sizes = [3, 1], strides = [1, 1]} : vector<3x9xf32> to vector<3x1xf32>
    %41 = vector.shape_cast %40 : vector<3x1xf32> to vector<3x1xf32>
    %42 = vector.broadcast %41 : vector<3x1xf32> to vector<3x128xf32>
    %43 = vector.extract_strided_slice %2 {offsets = [0, 0], sizes = [3, 1], strides = [1, 1]} : vector<3x9xf32> to vector<3x1xf32>
    %44 = vector.shape_cast %43 : vector<3x1xf32> to vector<3x1xf32>
    %45 = vector.broadcast %44 : vector<3x1xf32> to vector<3x128xf32>
    %46 = vector.extract_strided_slice %39 {offsets = [0, 0], sizes = [1, 128], strides = [1, 1]} : vector<8x128xf32> to vector<1x128xf32>
    %47 = vector.shape_cast %46 : vector<1x128xf32> to vector<1x128xf32>
    %48 = vector.broadcast %47 : vector<1x128xf32> to vector<3x128xf32>
    %49 = arith.mulf %45, %48 : vector<3x128xf32>
    %50 = arith.addf %42, %49 : vector<3x128xf32>
    %51 = vector.extract_strided_slice %2 {offsets = [0, 1], sizes = [3, 1], strides = [1, 1]} : vector<3x9xf32> to vector<3x1xf32>
    %52 = vector.shape_cast %51 : vector<3x1xf32> to vector<3x1xf32>
    %53 = vector.broadcast %52 : vector<3x1xf32> to vector<3x128xf32>
    %54 = vector.extract_strided_slice %39 {offsets = [1, 0], sizes = [1, 128], strides = [1, 1]} : vector<8x128xf32> to vector<1x128xf32>
    %55 = vector.shape_cast %54 : vector<1x128xf32> to vector<1x128xf32>
    %56 = vector.broadcast %55 : vector<1x128xf32> to vector<3x128xf32>
    %57 = arith.mulf %53, %56 : vector<3x128xf32>
    %58 = arith.addf %50, %57 : vector<3x128xf32>
    %59 = vector.extract_strided_slice %2 {offsets = [0, 2], sizes = [3, 1], strides = [1, 1]} : vector<3x9xf32> to vector<3x1xf32>
    %60 = vector.shape_cast %59 : vector<3x1xf32> to vector<3x1xf32>
    %61 = vector.broadcast %60 : vector<3x1xf32> to vector<3x128xf32>
    %62 = vector.extract_strided_slice %39 {offsets = [2, 0], sizes = [1, 128], strides = [1, 1]} : vector<8x128xf32> to vector<1x128xf32>
    %63 = vector.shape_cast %62 : vector<1x128xf32> to vector<1x128xf32>
    %64 = vector.broadcast %63 : vector<1x128xf32> to vector<3x128xf32>
    %65 = arith.mulf %61, %64 : vector<3x128xf32>
    %66 = arith.addf %58, %65 : vector<3x128xf32>
    %67 = vector.extract_strided_slice %2 {offsets = [0, 3], sizes = [3, 1], strides = [1, 1]} : vector<3x9xf32> to vector<3x1xf32>
    %68 = vector.shape_cast %67 : vector<3x1xf32> to vector<3x1xf32>
    %69 = vector.broadcast %68 : vector<3x1xf32> to vector<3x128xf32>
    %70 = vector.extract_strided_slice %39 {offsets = [3, 0], sizes = [1, 128], strides = [1, 1]} : vector<8x128xf32> to vector<1x128xf32>
    %71 = vector.shape_cast %70 : vector<1x128xf32> to vector<1x128xf32>
    %72 = vector.broadcast %71 : vector<1x128xf32> to vector<3x128xf32>
    %73 = arith.mulf %69, %72 : vector<3x128xf32>
    %74 = arith.addf %66, %73 : vector<3x128xf32>
    %75 = vector.extract_strided_slice %2 {offsets = [0, 4], sizes = [3, 1], strides = [1, 1]} : vector<3x9xf32> to vector<3x1xf32>
    %76 = vector.shape_cast %75 : vector<3x1xf32> to vector<3x1xf32>
    %77 = vector.broadcast %76 : vector<3x1xf32> to vector<3x128xf32>
    %78 = vector.extract_strided_slice %39 {offsets = [4, 0], sizes = [1, 128], strides = [1, 1]} : vector<8x128xf32> to vector<1x128xf32>
    %79 = vector.shape_cast %78 : vector<1x128xf32> to vector<1x128xf32>
    %80 = vector.broadcast %79 : vector<1x128xf32> to vector<3x128xf32>
    %81 = arith.mulf %77, %80 : vector<3x128xf32>
    %82 = arith.addf %74, %81 : vector<3x128xf32>
    %83 = vector.extract_strided_slice %2 {offsets = [0, 5], sizes = [3, 1], strides = [1, 1]} : vector<3x9xf32> to vector<3x1xf32>
    %84 = vector.shape_cast %83 : vector<3x1xf32> to vector<3x1xf32>
    %85 = vector.broadcast %84 : vector<3x1xf32> to vector<3x128xf32>
    %86 = vector.extract_strided_slice %39 {offsets = [5, 0], sizes = [1, 128], strides = [1, 1]} : vector<8x128xf32> to vector<1x128xf32>
    %87 = vector.shape_cast %86 : vector<1x128xf32> to vector<1x128xf32>
    %88 = vector.broadcast %87 : vector<1x128xf32> to vector<3x128xf32>
    %89 = arith.mulf %85, %88 : vector<3x128xf32>
    %90 = arith.addf %82, %89 : vector<3x128xf32>
    %91 = vector.extract_strided_slice %2 {offsets = [0, 6], sizes = [3, 1], strides = [1, 1]} : vector<3x9xf32> to vector<3x1xf32>
    %92 = vector.shape_cast %91 : vector<3x1xf32> to vector<3x1xf32>
    %93 = vector.broadcast %92 : vector<3x1xf32> to vector<3x128xf32>
    %94 = vector.extract_strided_slice %39 {offsets = [6, 0], sizes = [1, 128], strides = [1, 1]} : vector<8x128xf32> to vector<1x128xf32>
    %95 = vector.shape_cast %94 : vector<1x128xf32> to vector<1x128xf32>
    %96 = vector.broadcast %95 : vector<1x128xf32> to vector<3x128xf32>
    %97 = arith.mulf %93, %96 : vector<3x128xf32>
    %98 = arith.addf %90, %97 : vector<3x128xf32>
    %99 = vector.extract_strided_slice %2 {offsets = [0, 7], sizes = [3, 1], strides = [1, 1]} : vector<3x9xf32> to vector<3x1xf32>
    %100 = vector.shape_cast %99 : vector<3x1xf32> to vector<3x1xf32>
    %101 = vector.broadcast %100 : vector<3x1xf32> to vector<3x128xf32>
    %102 = vector.extract_strided_slice %39 {offsets = [7, 0], sizes = [1, 128], strides = [1, 1]} : vector<8x128xf32> to vector<1x128xf32>
    %103 = vector.shape_cast %102 : vector<1x128xf32> to vector<1x128xf32>
    %104 = vector.broadcast %103 : vector<1x128xf32> to vector<3x128xf32>
    %105 = arith.mulf %101, %104 : vector<3x128xf32>
    %106 = arith.addf %98, %105 : vector<3x128xf32>
    %107 = vector.extract_strided_slice %106 {offsets = [0, 0], sizes = [1, 128], strides = [1, 1]} : vector<3x128xf32> to vector<1x128xf32>
    %108 = vector.extract_strided_slice %106 {offsets = [1, 0], sizes = [1, 128], strides = [1, 1]} : vector<3x128xf32> to vector<1x128xf32>
    %109 = vector.extract_strided_slice %106 {offsets = [2, 0], sizes = [1, 128], strides = [1, 1]} : vector<3x128xf32> to vector<1x128xf32>
    %110 = arith.maximumf %107, %108 : vector<1x128xf32>
    %111 = arith.maximumf %110, %109 : vector<1x128xf32>
    %112 = arith.subf %107, %111 : vector<1x128xf32>
    %113 = math.exp %112 : vector<1x128xf32>
    %114 = arith.subf %108, %111 : vector<1x128xf32>
    %115 = math.exp %114 : vector<1x128xf32>
    %116 = arith.subf %109, %111 : vector<1x128xf32>
    %117 = math.exp %116 : vector<1x128xf32>
    %118 = arith.addf %113, %115 : vector<1x128xf32>
    %119 = arith.addf %118, %117 : vector<1x128xf32>
    %120 = tpu.reciprocal %119 {approx = true} : vector<1x128xf32> -> vector<1x128xf32>
    %121 = arith.mulf %119, %120 : vector<1x128xf32>
    %cst_5 = arith.constant 2.000000e+00 : f32
    %122 = vector.broadcast %cst_5 : f32 to vector<1x128xf32>
    %123 = arith.subf %122, %121 : vector<1x128xf32>
    %124 = arith.mulf %120, %123 : vector<1x128xf32>
    %125 = arith.mulf %113, %124 : vector<1x128xf32>
    %126 = arith.mulf %115, %124 : vector<1x128xf32>
    %127 = arith.mulf %117, %124 : vector<1x128xf32>
    %128 = tpu.concatenate %125, %126, %127 in 0 : vector<1x128xf32>, vector<1x128xf32>, vector<1x128xf32> -> vector<3x128xf32>
    %c0_6 = arith.constant 0 : index
    %c0_7 = arith.constant 0 : index
    %129 = vector.load %arg4[%c0_6, %c0_7] : memref<3x128xf32, #tpu.memory_space<vmem>>, vector<3x128xf32>
    tpu.vector_store %arg4[%c0_6, %c0_7], %128 {strides = array<i32>} : memref<3x128xf32, #tpu.memory_space<vmem>>, vector<3x128xf32>,
    return
  }
  func.func @transform_0(%arg0: i32) -> (i32, i32) {
    %c0_i32 = arith.constant 0 : i32
    %c0_i32_0 = arith.constant 0 : i32
    return %c0_i32, %arg0 : i32, i32
  }
  func.func @transform_1(%arg0: i32) -> (i32, i32) {
    %c0_i32 = arith.constant 0 : i32
    %c0_i32_0 = arith.constant 0 : i32
    %c0_i32_1 = arith.constant 0 : i32
    return %c0_i32, %c0_i32_0 : i32, i32
  }
  func.func @transform_2(%arg0: i32) -> (i32, i32) {
    %c0_i32 = arith.constant 0 : i32
    %c0_i32_0 = arith.constant 0 : i32
    %c0_i32_1 = arith.constant 0 : i32
    return %c0_i32, %c0_i32_0 : i32, i32
  }
  func.func @transform_3(%arg0: i32) -> (i32, i32) {
    %c0_i32 = arith.constant 0 : i32
    %c0_i32_0 = arith.constant 0 : i32
    return %c0_i32, %arg0 : i32, i32
  }
}

</mosaic_0001>

<llo_original>
// kernel: tpu_custom_call.1
$region0: #{tpu_custom_call.1}
  #allocation0 [shape = 'u32[]', space=smem, size = 0x4, offset = 0x4, fixed_abs, tag = 'smem constant byte address 0x4 - core index']
  #allocation1 [shape = 'u32[144,128]{1,0:T(1,128)}', space=vmem, size = 0x12000, scoped, tag = 'internal scratch']
  %s0 = inlined_call_operand.hbm [shape: f32[4,128], index: 0, kind: input, shape index: {}]
  %s1 = inlined_call_operand.hbm [shape: f32[8,5], index: 1, kind: input, shape index: {}]
  %s2 = inlined_call_operand.vmem [shape: f32[3,9], index: 2, kind: input, shape index: {}]
  %s3 = inlined_call_operand.hbm [shape: f32[3,128], index: 3, kind: output, shape index: {}]
  %s4 = sld [smem:[#allocation0]]
  $region30: #{tpu_custom_call.1} parent=0
    _
  %s6 = ssub.s32 1, %s4
  %s7 = scalar_select 0, %s6, %s4
  $region1: #{tpu_custom_call.1} parent=0
    #allocation2 [shape = 'u8[2048]{0}', space=vmem, size = 0x800, scoped, tag = 'input window, operand 0, single buffered']
    #allocation3 [shape = 's32[1]{0}', space=sflag, size = 0x4, scoped, tag = 'scoped memory for tpu_custom_call.1']
    #allocation4 [shape = 's32[1]{0}', space=sflag, size = 0x4, scoped, tag = 'scoped memory for tpu_custom_call.1']
    #allocation5 [shape = 'u8[4096]{0}', space=vmem, size = 0x1000, scoped, tag = 'input window, operand 1, single buffered']
    #allocation6 [shape = 's32[1]{0}', space=sflag, size = 0x4, scoped, tag = 'scoped memory for tpu_custom_call.1']
    #allocation7 [shape = 'u8[2048]{0}', space=vmem, size = 0x800, scoped, tag = 'output window, operand 0, single buffered']
    %8 = vsyncpa [#allocation3], 0
    %9 = vsyncpa [#allocation6], 0
    %10 = vsyncpa [#allocation4], 0
    // Predicated region
    $region2: #{tpu_custom_call.1} parent=1 // pred_check
      _
    $region3: #{tpu_custom_call.1} parent=1 // pred_check_branch
      %12 = sbr.rel (0) target = $region5
    $region4: #{tpu_custom_call.1} parent=1 // pred_region
      %s14 = ssub.s32 64, 64
      %15 = vsyncadd [#allocation3], %s14
      %s17 = sshll.u32 [#allocation2], 4
      %s18 = int_to_ptr.vmem [resolvable:$true] %s17
      %20 = dma.hbm_to_vmem [thread:$0]  %s0, 64, %s18, [#allocation3]
    $region5: #{tpu_custom_call.1} parent=1 // pred_fallthru
      _
    // Predicated region
    $region6: #{tpu_custom_call.1} parent=1 // pred_check
      _
    $region7: #{tpu_custom_call.1} parent=1 // pred_check_branch
      %22 = sbr.rel (0) target = $region9
    $region8: #{tpu_custom_call.1} parent=1 // pred_region
      %s24 = ssub.s32 128, 128
      %25 = vsyncadd [#allocation6], %s24
      %s27 = sshll.u32 [#allocation5], 4
      %s28 = int_to_ptr.vmem [resolvable:$true] %s27
      %30 = dma.hbm_to_vmem [thread:$0]  %s1, 128, %s28, [#allocation6]
    $region9: #{tpu_custom_call.1} parent=1 // pred_fallthru
      _
    // Predicated region
    $region10: #{tpu_custom_call.1} parent=1 // pred_check
      _
    $region11: #{tpu_custom_call.1} parent=1 // pred_check_branch
      %32 = sbr.rel (0) target = $region13
    $region12: #{tpu_custom_call.1} parent=1 // pred_region
      _
    $region13: #{tpu_custom_call.1} parent=1 // pred_fallthru
      _
    // Predicated region
    $region14: #{tpu_custom_call.1} parent=1 // pred_check
      _
    $region15: #{tpu_custom_call.1} parent=1 // pred_check_branch
      %34 = sbr.rel (0) target = $region17
    $region16: #{tpu_custom_call.1} parent=1 // pred_region
      %35 = dma.done [#allocation3], 64
    $region17: #{tpu_custom_call.1} parent=1 // pred_fallthru
      _
    // Predicated region
    $region18: #{tpu_custom_call.1} parent=1 // pred_check
      _
    $region19: #{tpu_custom_call.1} parent=1 // pred_check_branch
      %37 = sbr.rel (0) target = $region21
    $region20: #{tpu_custom_call.1} parent=1 // pred_region
      %38 = dma.done [#allocation6], 128
    $region21: #{tpu_custom_call.1} parent=1 // pred_fallthru
      _
    %v39 = vld [vmem:[#allocation2] sm:$0xf]
    %v40 = vld [vmem:[#allocation5] sm:$0xff]
    %v41 = vld [vmem:[%s2] sm:$0x7]
    %43 = vset.pattern.permute.xlu0 4
    %44 = vperm.xlu0 %43, %v40
    %v45 = vpop.permute.xlu0 %44
    %47 = vset.pattern.permute.xlu0 0
    %48 = vperm.xlu0 %47, %v40
    %v49 = vpop.permute.xlu0 %48
    %v51 = vlaneseq
    %v52 = vshrl.u32 %v51, 7
    %v53 = vsub.s32 0, %v52
    %v54 = vrot.slane %v39, %v53
    %v55 = vmul.f32 %v49, %v54
    %v56 = vadd.f32 %v45, %v55
    %57 = vset.pattern.permute.xlu0 1
    %58 = vperm.xlu0 %57, %v40
    %v59 = vpop.permute.xlu0 %58
    %v61 = vlaneseq
    %v62 = vshrl.u32 %v61, 7
    %v63 = vsub.s32 1, %v62
    %v64 = vrot.slane %v39, %v63
    %v65 = vmul.f32 %v59, %v64
    %v66 = vadd.f32 %v56, %v65
    %67 = vset.pattern.permute.xlu0 2
    %68 = vperm.xlu0 %67, %v40
    %v69 = vpop.permute.xlu0 %68
    %v71 = vlaneseq
    %v72 = vshrl.u32 %v71, 7
    %v73 = vsub.s32 2, %v72
    %v74 = vrot.slane %v39, %v73
    %v75 = vmul.f32 %v69, %v74
    %v76 = vadd.f32 %v66, %v75
    %77 = vset.pattern.permute.xlu0 3
    %78 = vperm.xlu0 %77, %v40
    %v79 = vpop.permute.xlu0 %78
    %v81 = vlaneseq
    %v82 = vshrl.u32 %v81, 7
    %v83 = vsub.s32 3, %v82
    %v84 = vrot.slane %v39, %v83
    %v85 = vmul.f32 %v79, %v84
    %v86 = vadd.f32 %v76, %v85
    %v87 = vmax.f32 %v86, 0.0
    %89 = vset.pattern.permute.xlu0 8
    %90 = vperm.xlu0 %89, %v41
    %v91 = vpop.permute.xlu0 %90
    %93 = vset.pattern.permute.xlu0 0
    %94 = vperm.xlu0 %93, %v41
    %v95 = vpop.permute.xlu0 %94
    %v97 = vlaneseq
    %v98 = vshrl.u32 %v97, 7
    %v99 = vsub.s32 0, %v98
    %v100 = vrot.slane %v87, %v99
    %v101 = vmul.f32 %v95, %v100
    %v102 = vadd.f32 %v91, %v101
    %103 = vset.pattern.permute.xlu0 1
    %104 = vperm.xlu0 %103, %v41
    %v105 = vpop.permute.xlu0 %104
    %v107 = vlaneseq
    %v108 = vshrl.u32 %v107, 7
    %v109 = vsub.s32 1, %v108
    %v110 = vrot.slane %v87, %v109
    %v111 = vmul.f32 %v105, %v110
    %v112 = vadd.f32 %v102, %v111
    %113 = vset.pattern.permute.xlu0 2
    %114 = vperm.xlu0 %113, %v41
    %v115 = vpop.permute.xlu0 %114
    %v117 = vlaneseq
    %v118 = vshrl.u32 %v117, 7
    %v119 = vsub.s32 2, %v118
    %v120 = vrot.slane %v87, %v119
    %v121 = vmul.f32 %v115, %v120
    %v122 = vadd.f32 %v112, %v121
    %123 = vset.pattern.permute.xlu0 3
    %124 = vperm.xlu0 %123, %v41
    %v125 = vpop.permute.xlu0 %124
    %v127 = vlaneseq
    %v128 = vshrl.u32 %v127, 7
    %v129 = vsub.s32 3, %v128
    %v130 = vrot.slane %v87, %v129
    %v131 = vmul.f32 %v125, %v130
    %v132 = vadd.f32 %v122, %v131
    %133 = vset.pattern.permute.xlu0 4
    %134 = vperm.xlu0 %133, %v41
    %v135 = vpop.permute.xlu0 %134
    %v137 = vlaneseq
    %v138 = vshrl.u32 %v137, 7
    %v139 = vsub.s32 4, %v138
    %v140 = vrot.slane %v87, %v139
    %v141 = vmul.f32 %v135, %v140
    %v142 = vadd.f32 %v132, %v141
    %143 = vset.pattern.permute.xlu0 5
    %144 = vperm.xlu0 %143, %v41
    %v145 = vpop.permute.xlu0 %144
    %v147 = vlaneseq
    %v148 = vshrl.u32 %v147, 7
    %v149 = vsub.s32 5, %v148
    %v150 = vrot.slane %v87, %v149
    %v151 = vmul.f32 %v145, %v150
    %v152 = vadd.f32 %v142, %v151
    %153 = vset.pattern.permute.xlu0 6
    %154 = vperm.xlu0 %153, %v41
    %v155 = vpop.permute.xlu0 %154
    %v157 = vlaneseq
    %v158 = vshrl.u32 %v157, 7
    %v159 = vsub.s32 6, %v158
    %v160 = vrot.slane %v87, %v159
    %v161 = vmul.f32 %v155, %v160
    %v162 = vadd.f32 %v152, %v161
    %163 = vset.pattern.permute.xlu0 7
    %164 = vperm.xlu0 %163, %v41
    %v165 = vpop.permute.xlu0 %164
    %v167 = vlaneseq
    %v168 = vshrl.u32 %v167, 7
    %v169 = vsub.s32 7, %v168
    %v170 = vrot.slane %v87, %v169
    %v171 = vmul.f32 %v165, %v170
    %v172 = vadd.f32 %v162, %v171
    %v174 = vrot.slane %v172, 1
    %v176 = vmax.f32 %v172, %v174
    %v177 = vrot.slane %v172, 2
    %v179 = vmax.f32 %v176, %v177
    %v180 = vsub.f32 %v172, %v179
    %v181 = vmul.f32 %v180, 1.442695
    %v182 = vpow.pop %v181
    %v184 = vrot.slane %v179, 7
    %v186 = vsub.f32 %v172, %v184
    %v187 = vmul.f32 %v186, 1.442695
    %v188 = vpow.pop %v187
    %v189 = vrot.slane %v179, 6
    %v191 = vsub.f32 %v172, %v189
    %v192 = vmul.f32 %v191, 1.442695
    %v193 = vpow.pop %v192
    %v195 = vrot.slane %v188, 1
    %v197 = vadd.f32 %v182, %v195
    %v199 = vrot.slane %v193, 2
    %v201 = vadd.f32 %v197, %v199
    %v202 = vrcp.pop %v201
    %v203 = vmul.f32 %v201, %v202
    %v204 = vsub.f32 2.0, %v203
    %v205 = vmul.f32 %v202, %v204
    %v206 = vmul.f32 %v182, %v205
    %v208 = vrot.slane %v205, 7
    %v210 = vmul.f32 %v188, %v208
    %v211 = vrot.slane %v205, 6
    %v213 = vmul.f32 %v193, %v211
    %vm214 = vcmask 1040384
    %v215 = vsel %vm214, %v206, %v210
    %vm216 = vcmask 1041408
    %v217 = vsel %vm216, %v215, %v213
    %218 = vst [vmem:[#allocation7] sm:$0x7] %v217
    // Predicated region
    $region22: #{tpu_custom_call.1} parent=1 // pred_check
      _
    $region23: #{tpu_custom_call.1} parent=1 // pred_check_branch
      %220 = sbr.rel (0) target = $region25
    $region24: #{tpu_custom_call.1} parent=1 // pred_region
      %s222 = ssub.s32 64, 64
      %223 = vsyncadd [#allocation4], %s222
      %s225 = sshll.u32 [#allocation7], 4
      %s226 = int_to_ptr.vmem [resolvable:$true] %s225
      %228 = dma.vmem_to_hbm [thread:$0]  %s226, 64, %s3, [#allocation4]
    $region25: #{tpu_custom_call.1} parent=1 // pred_fallthru
      _
    // Predicated region
    $region26: #{tpu_custom_call.1} parent=1 // pred_check
      _
    $region27: #{tpu_custom_call.1} parent=1 // pred_check_branch
      %230 = sbr.rel (0) target = $region29
    $region28: #{tpu_custom_call.1} parent=1 // pred_region
      %231 = dma.done [#allocation4], 64
    $region29: #{tpu_custom_call.1} parent=1 // pred_fallthru
      _
    %232 = vsyncpa [#allocation3], 1
    %233 = vsyncpa [#allocation6], 1
    %234 = vsyncpa [#allocation4], 1

</llo_original>
